<compile_context>
chip_gen: v7x
topology: tpu7x:2x2x1
jax: 0.10.0
libtpu: 0.0.40
codegen_flags: <defaults>
</compile_context>

<pallas_src>
import functools

import jax
import jax.numpy as jnp
from jax.experimental import pallas as pl
from jax.experimental.pallas import tpu as pltpu

_LANES = 128


def _round_up(n, m):
    return ((n + m - 1) // m) * m


# ----------------------------------------------------------------------------
# In-kernel building blocks
# ----------------------------------------------------------------------------
def _cross_entropy(logits, tgt_ref, num_classes):
    """Mean cross entropy over the batch.

    logits: (B, OP) f32, OP lane-padded to a multiple of 128 (padded columns
    are masked out).  tgt_ref: SMEM (B,) int32.  Returns a scalar f32.
    """
    B, OP = logits.shape
    ids = jax.lax.broadcasted_iota(jnp.int32, (B, OP), 1)
    valid = ids < num_classes
    masked = jnp.where(valid, logits, jnp.float32(-1e30))       # kill padded lanes
    m = jnp.max(masked, axis=1, keepdims=True)
    lse = m + jnp.log(jnp.sum(jnp.exp(masked - m), axis=1, keepdims=True))
    # Broadcast the SMEM targets into one (B, OP) int32 vreg (B small & static).
    row_ids = jax.lax.broadcasted_iota(jnp.int32, (B, OP), 0)
    tgt_b = jnp.zeros((B, OP), jnp.int32)
    for b in range(B):
        tgt_b = jnp.where(row_ids == b, tgt_ref[b], tgt_b)
    onehot = ids == tgt_b          # never hits padded lanes (targets < num_classes)
    tgt_logit = jnp.sum(jnp.where(onehot, logits, 0.0), axis=1, keepdims=True)
    return jnp.sum(lse - tgt_logit) * (1.0 / B)


def _mlp_compute(x_ref, w1_ref, b1_ref, w2_ref, b2_ref, w3_ref, b3_ref):
    # bf16 matmul operands, f32 accumulate / bias / ReLU.
    h = jnp.dot(x_ref[...], w1_ref[...],
                preferred_element_type=jnp.float32) + b1_ref[...]
    h = jnp.maximum(h, 0.0)
    h = jnp.dot(h.astype(jnp.bfloat16), w2_ref[...],
                preferred_element_type=jnp.float32) + b2_ref[...]
    h = jnp.maximum(h, 0.0)
    return jnp.dot(h.astype(jnp.bfloat16), w3_ref[...],
                   preferred_element_type=jnp.float32) + b3_ref[...]


def _cnn_compute(p1_ref, w1_ref, b1_ref, w2_ref, b2_ref, wf_ref, bf_ref):
    # p1_ref: conv1 im2col patches built in the wrapper: (B*3*3, 4*Cin) bf16.
    # w1_ref: (4*Cin, hid), w2_ref: (4*hid, hid), wf_ref: (4*hid, OP) bf16.
    B = p1_ref.shape[0] // 9          # spatial fixed by the FC: 4x4 -> 3x3 -> 2x2
    hid = w1_ref.shape[1]

    # Conv1 as a single matmul (K = 4*Cin).
    h1 = jnp.dot(p1_ref[...], w1_ref[...],
                 preferred_element_type=jnp.float32) + b1_ref[...]
    h1 = jnp.maximum(h1, 0.0)                                   # (B*9, hid) f32

    # Conv2 im2col: lane-concat the 4 taps -> one K = 4*hid (=128) matmul.
    h1v = h1.reshape(B, 3, 3, hid).astype(jnp.bfloat16)
    p2 = jnp.concatenate(
        [h1v[:, di:di + 2, dj:dj + 2, :] for di in range(2) for dj in range(2)],
        axis=-1).reshape(B * 4, 4 * hid)                        # (B*4, 4*hid) bf16
    h2 = jnp.dot(p2, w2_ref[...],
                 preferred_element_type=jnp.float32) + b2_ref[...]
    h2 = jnp.maximum(h2, 0.0)                                   # (B*4, hid) f32

    # Flatten in NHWC order (FC weight permuted accordingly in the wrapper).
    feat = h2.reshape(B, 4 * hid).astype(jnp.bfloat16)
    return jnp.dot(feat, wf_ref[...],
                   preferred_element_type=jnp.float32) + bf_ref[...]


# ----------------------------------------------------------------------------
# Kernels (with / without loss head)
# ----------------------------------------------------------------------------
def _mlp_kernel(x_ref, w1, b1, w2, b2, w3, b3, logits_ref):
    logits_ref[...] = _mlp_compute(x_ref, w1, b1, w2, b2, w3, b3)


def _mlp_loss_kernel(x_ref, w1, b1, w2, b2, w3, b3, tgt_ref,
                     logits_ref, loss_ref, *, num_classes):
    logits = _mlp_compute(x_ref, w1, b1, w2, b2, w3, b3)
    logits_ref[...] = logits
    loss_ref[0, 0] = _cross_entropy(logits, tgt_ref, num_classes)


def _cnn_kernel(p1_ref, w1, b1, w2, b2, wf, bf, logits_ref):
    logits_ref[...] = _cnn_compute(p1_ref, w1, b1, w2, b2, wf, bf)


def _cnn_loss_kernel(p1_ref, w1, b1, w2, b2, wf, bf, tgt_ref,
                     logits_ref, loss_ref, *, num_classes):
    logits = _cnn_compute(p1_ref, w1, b1, w2, b2, wf, bf)
    logits_ref[...] = logits
    loss_ref[0, 0] = _cross_entropy(logits, tgt_ref, num_classes)


_VMEM = pl.BlockSpec(memory_space=pltpu.MemorySpace.VMEM)
_SMEM = pl.BlockSpec(memory_space=pltpu.MemorySpace.SMEM)


def _run(kernel, vmem_args, tgt, batch, padded_classes):
    """Grid-less pallas_call.  Logits are lane-dense (B, padded_classes);
    targets (if any) live in SMEM; the scalar loss is an SMEM output."""
    if tgt is None:
        return pl.pallas_call(
            kernel,
            out_shape=jax.ShapeDtypeStruct((batch, padded_classes), jnp.float32),
            in_specs=[_VMEM] * len(vmem_args),
            out_specs=_VMEM,
        )(*vmem_args)
    return pl.pallas_call(
        kernel,
        out_shape=(jax.ShapeDtypeStruct((batch, padded_classes), jnp.float32),
                   jax.ShapeDtypeStruct((1, 1), jnp.float32)),
        in_specs=[_VMEM] * len(vmem_args) + [_SMEM],
        out_specs=(_VMEM, _SMEM),
    )(*vmem_args, tgt)


# ----------------------------------------------------------------------------
# Python wrappers replicating NetworkA.forward
# ----------------------------------------------------------------------------
def mlp_forward(model, x, targets=None, flip=False):
    params, out_dim = model["params"], model["out_dim"]
    B = x.shape[0]
    OP = params[-1].shape[1]                       # padded class dim (from b3)
    xb = x.astype(jnp.bfloat16)
    if targets is None:
        logits_p = _run(_mlp_kernel, (xb, *params), None, B, OP)
        return logits_p[:, :out_dim]
    tgt = targets.astype(jnp.int32).reshape(-1)
    kern = functools.partial(_mlp_loss_kernel, num_classes=out_dim)
    logits_p, loss = _run(kern, (xb, *params), tgt, B, OP)
    logits = logits_p[:, :out_dim]
    loss = loss[0, 0]
    return (loss, logits) if flip else (logits, loss)


def _im2col_k2(x_nhwc):
    """(B, H, W, C) -> (B*(H-1)*(W-1), 4*C) patches, tap order (di, dj, c)."""
    B, H, W, C = x_nhwc.shape
    Ho, Wo = H - 1, W - 1
    taps = [x_nhwc[:, di:di + Ho, dj:dj + Wo, :]
            for di in range(2) for dj in range(2)]
    return jnp.concatenate(taps, axis=-1).reshape(B * Ho * Wo, 4 * C)


def cnn_forward(model, x_nchw, targets=None, flip=False):
    params, out_dim = model["params"], model["out_dim"]
    B = x_nchw.shape[0]
    OP = params[-1].shape[1]
    x = jnp.transpose(x_nchw, (0, 2, 3, 1))            # NCHW -> NHWC (glue, XLA side)
    p1 = _im2col_k2(x).astype(jnp.bfloat16)            # conv1 im2col done in XLA
    if targets is None:
        logits_p = _run(_cnn_kernel, (p1, *params), None, B, OP)
        return logits_p[:, :out_dim]
    tgt = targets.astype(jnp.int32).reshape(-1)
    kern = functools.partial(_cnn_loss_kernel, num_classes=out_dim)
    logits_p, loss = _run(kern, (p1, *params), tgt, B, OP)
    logits = logits_p[:, :out_dim]
    loss = loss[0, 0]
    return (loss, logits) if flip else (logits, loss)


# ----------------------------------------------------------------------------
# Deterministic parameter init (PyTorch layout) + conversion to kernel layout
# ----------------------------------------------------------------------------
def _uniform(key, shape, fan_in):
    bound = 1.0 / jnp.sqrt(jnp.float32(fan_in))
    return jax.random.uniform(key, shape, jnp.float32, -bound, bound)


def init_mlp_torch(key, in_dim, hid_dim, out_dim):
    ks = jax.random.split(key, 6)
    w1 = _uniform(ks[0], (hid_dim, in_dim), in_dim)
    b1 = _uniform(ks[1], (hid_dim,), in_dim)
    w2 = _uniform(ks[2], (hid_dim, hid_dim), hid_dim)
    b2 = _uniform(ks[3], (hid_dim,), hid_dim)
    w3 = _uniform(ks[4], (out_dim, hid_dim), hid_dim)
    b3 = _uniform(ks[5], (out_dim,), hid_dim)
    return w1, b1, w2, b2, w3, b3


def mlp_torch_to_kernel(p):
    w1, b1, w2, b2, w3, b3 = p
    out_dim = w3.shape[0]
    OP = max(_LANES, _round_up(out_dim, _LANES))
    w3p = jnp.pad(w3.T, ((0, 0), (0, OP - out_dim)))
    b3p = jnp.pad(b3, (0, OP - out_dim))[None, :]
    params = (w1.T.astype(jnp.bfloat16), b1[None, :],
              w2.T.astype(jnp.bfloat16), b2[None, :],
              w3p.astype(jnp.bfloat16), b3p)
    return {"params": params, "out_dim": out_dim}


def init_cnn_torch(key, in_dim, hid_dim, out_dim):
    ks = jax.random.split(key, 6)
    fan1 = in_dim * 2 * 2
    fan2 = hid_dim * 2 * 2
    fanf = hid_dim * 2 * 2
    w1 = _uniform(ks[0], (hid_dim, in_dim, 2, 2), fan1)     # OIHW
    b1 = _uniform(ks[1], (hid_dim,), fan1)
    w2 = _uniform(ks[2], (hid_dim, hid_dim, 2, 2), fan2)
    b2 = _uniform(ks[3], (hid_dim,), fan2)
    wf = _uniform(ks[4], (out_dim, hid_dim * 2 * 2), fanf)  # flatten order (c,h,w)
    bf = _uniform(ks[5], (out_dim,), fanf)
    return w1, b1, w2, b2, wf, bf


def cnn_torch_to_kernel(p):
    w1, b1, w2, b2, wf, bf = p
    hid, cin = w1.shape[0], w1.shape[1]
    out_dim = wf.shape[0]
    OP = max(_LANES, _round_up(out_dim, _LANES))
    # Conv weights -> im2col layout: rows ordered (di, dj, c).
    w1k = jnp.transpose(w1, (2, 3, 1, 0)).reshape(4 * cin, hid)
    w2k = jnp.transpose(w2, (2, 3, 1, 0)).reshape(4 * hid, hid)
    # FC: PyTorch flatten of NCHW is (c,h,w); kernel flatten of NHWC is (h,w,c).
    wfk = (wf.T.reshape(hid, 2, 2, out_dim)
               .transpose(1, 2, 0, 3)
               .reshape(4 * hid, out_dim))
    wfp = jnp.pad(wfk, ((0, 0), (0, OP - out_dim)))
    bfp = jnp.pad(bf, (0, OP - out_dim))[None, :]
    params = (w1k.astype(jnp.bfloat16), b1[None, :],
              w2k.astype(jnp.bfloat16), b2[None, :],
              wfp.astype(jnp.bfloat16), bfp)
    return {"params": params, "out_dim": out_dim}


# ----------------------------------------------------------------------------
# Pure-JAX references (PyTorch layout, f32) for correctness checks
# ----------------------------------------------------------------------------
def _ref_mlp(p, x):
    w1, b1, w2, b2, w3, b3 = p
    h = jnp.maximum(x @ w1.T + b1, 0.0)
    h = jnp.maximum(h @ w2.T + b2, 0.0)
    return h @ w3.T + b3


def _ref_cnn(p, x_nchw):
    w1, b1, w2, b2, wf, bf = p
    dn = ("NCHW", "OIHW", "NCHW")
    h = jax.lax.conv_general_dilated(x_nchw, w1, (1, 1), "VALID",
                                     dimension_numbers=dn) + b1[None, :, None, None]
    h = jnp.maximum(h, 0.0)
    h = jax.lax.conv_general_dilated(h, w2, (1, 1), "VALID",
                                     dimension_numbers=dn) + b2[None, :, None, None]
    h = jnp.maximum(h, 0.0)
    feat = h.reshape(h.shape[0], -1)
    return feat @ wf.T + bf


def _ref_ce(logits, targets):
    logp = jax.nn.log_softmax(logits, axis=-1)
    return -jnp.mean(logp[jnp.arange(logits.shape[0]), targets])


# ----------------------------------------------------------------------------
if __name__ == "__main__":
    key = jax.random.PRNGKey(0)
    k_pm, k_pc, k_xm, k_xc, k_t = jax.random.split(key, 5)

    B, IN_DIM, HID, OUT = 8, 32, 32, 8
    CIN, SPATIAL = 4, 4   # two k=2 VALID convs: 4x4 -> 3x3 -> 2x2 (matches hid*2*2 FC)
    TOL = 5e-2            # bf16 matmul operands (f32 accumulate) vs f32 reference

    targets = jax.random.randint(k_t, (B,), 0, OUT)

    # ---- NetworkA('mlp', ...) ----
    mlp_torch = init_mlp_torch(k_pm, IN_DIM, HID, OUT)
    mlp_model = mlp_torch_to_kernel(mlp_torch)
    x_mlp = jax.random.normal(k_xm, (B, IN_DIM), jnp.float32)

    logits_m, loss_m = mlp_forward(mlp_model, x_mlp, targets)
    loss_m_f, logits_m_f = mlp_forward(mlp_model, x_mlp, targets, flip=True)
    logits_m_only = mlp_forward(mlp_model, x_mlp)
    jax.block_until_ready((logits_m, loss_m, loss_m_f, logits_m_f, logits_m_only))

    ref_lm = _ref_mlp(mlp_torch, x_mlp)
    assert jnp.allclose(logits_m, ref_lm, rtol=TOL, atol=TOL)
    assert jnp.allclose(logits_m_only, ref_lm, rtol=TOL, atol=TOL)
    assert jnp.allclose(loss_m, _ref_ce(ref_lm, targets), rtol=TOL, atol=TOL)
    assert jnp.allclose(loss_m, loss_m_f)
    assert jnp.allclose(logits_m, logits_m_f)

    # ---- NetworkA('cnn', ...) ----
    cnn_torch = init_cnn_torch(k_pc, CIN, HID, OUT)
    cnn_model = cnn_torch_to_kernel(cnn_torch)
    x_cnn = jax.random.normal(k_xc, (B, CIN, SPATIAL, SPATIAL), jnp.float32)  # NCHW

    logits_c, loss_c = cnn_forward(cnn_model, x_cnn, targets)
    loss_c_f, logits_c_f = cnn_forward(cnn_model, x_cnn, targets, flip=True)
    logits_c_only = cnn_forward(cnn_model, x_cnn)
    jax.block_until_ready((logits_c, loss_c, loss_c_f, logits_c_f, logits_c_only))

    ref_lc = _ref_cnn(cnn_torch, x_cnn)
    assert jnp.allclose(logits_c, ref_lc, rtol=TOL, atol=TOL)
    assert jnp.allclose(logits_c_only, ref_lc, rtol=TOL, atol=TOL)
    assert jnp.allclose(loss_c, _ref_ce(ref_lc, targets), rtol=TOL, atol=TOL)
    assert jnp.allclose(loss_c, loss_c_f)
    assert jnp.allclose(logits_c, logits_c_f)

    print("KERNEL_OK")
</pallas_src>

<mosaic_0001>
module attributes {stable_mosaic.version = 11 : i64} {
  func.func @_mlp_loss_kernel(%arg0: memref<8x32xbf16, #tpu.memory_space<vmem>>, %arg1: memref<32x32xbf16, #tpu.memory_space<vmem>>, %arg2: memref<1x32xf32, #tpu.memory_space<vmem>>, %arg3: memref<32x32xbf16, #tpu.memory_space<vmem>>, %arg4: memref<1x32xf32, #tpu.memory_space<vmem>>, %arg5: memref<32x128xbf16, #tpu.memory_space<vmem>>, %arg6: memref<1x128xf32, #tpu.memory_space<vmem>>, %arg7: memref<8xi32, #tpu.memory_space<smem>>, %arg8: memref<8x128xf32, #tpu.memory_space<vmem>>, %arg9: memref<1x1xf32, #tpu.memory_space<smem>>) attributes {dimension_semantics = [], scalar_prefetch = 0 : i64, scratch_operands = 0 : i64, tpu.core_type = #tpu.core_type<tc>} {
    %c0 = arith.constant 0 : index
    %c0_0 = arith.constant 0 : index
    %0 = vector.load %arg0[%c0, %c0_0] : memref<8x32xbf16, #tpu.memory_space<vmem>>, vector<8x32xbf16>
    %c0_1 = arith.constant 0 : index
    %c0_2 = arith.constant 0 : index
    %1 = vector.load %arg1[%c0_1, %c0_2] : memref<32x32xbf16, #tpu.memory_space<vmem>>, vector<32x32xbf16>
    %cst = arith.constant dense<0.000000e+00> : vector<8x32xf32>
    %2 = tpu.matmul %0, %1, %cst {dimension_numbers = #tpu.dot_dimension_numbers<[1], [0], [0], [1], [0, 0, 1, 1], [], []>} : vector<8x32xbf16>, vector<32x32xbf16>, vector<8x32xf32> -> vector<8x32xf32>
    %c0_3 = arith.constant 0 : index
    %c0_4 = arith.constant 0 : index
    %3 = vector.load %arg2[%c0_3, %c0_4] : memref<1x32xf32, #tpu.memory_space<vmem>>, vector<1x32xf32>
    %4 = vector.broadcast %3 : vector<1x32xf32> to vector<8x32xf32>
    %5 = arith.addf %2, %4 : vector<8x32xf32>
    %cst_5 = arith.constant 0.000000e+00 : f32
    %6 = vector.broadcast %cst_5 : f32 to vector<8x32xf32>
    %7 = arith.maximumf %5, %6 : vector<8x32xf32>
    %8 = arith.truncf %7 : vector<8x32xf32> to vector<8x32xbf16>
    %c0_6 = arith.constant 0 : index
    %c0_7 = arith.constant 0 : index
    %9 = vector.load %arg3[%c0_6, %c0_7] : memref<32x32xbf16, #tpu.memory_space<vmem>>, vector<32x32xbf16>
    %cst_8 = arith.constant dense<0.000000e+00> : vector<8x32xf32>
    %10 = tpu.matmul %8, %9, %cst_8 {dimension_numbers = #tpu.dot_dimension_numbers<[1], [0], [0], [1], [0, 0, 1, 1], [], []>} : vector<8x32xbf16>, vector<32x32xbf16>, vector<8x32xf32> -> vector<8x32xf32>
    %c0_9 = arith.constant 0 : index
    %c0_10 = arith.constant 0 : index
    %11 = vector.load %arg4[%c0_9, %c0_10] : memref<1x32xf32, #tpu.memory_space<vmem>>, vector<1x32xf32>
    %12 = vector.broadcast %11 : vector<1x32xf32> to vector<8x32xf32>
    %13 = arith.addf %10, %12 : vector<8x32xf32>
    %cst_11 = arith.constant 0.000000e+00 : f32
    %14 = vector.broadcast %cst_11 : f32 to vector<8x32xf32>
    %15 = arith.maximumf %13, %14 : vector<8x32xf32>
    %16 = arith.truncf %15 : vector<8x32xf32> to vector<8x32xbf16>
    %c0_12 = arith.constant 0 : index
    %c0_13 = arith.constant 0 : index
    %17 = vector.load %arg5[%c0_12, %c0_13] : memref<32x128xbf16, #tpu.memory_space<vmem>>, vector<32x128xbf16>
    %cst_14 = arith.constant dense<0.000000e+00> : vector<8x128xf32>
    %18 = tpu.matmul %16, %17, %cst_14 {dimension_numbers = #tpu.dot_dimension_numbers<[1], [0], [0], [1], [0, 0, 1, 1], [], []>} : vector<8x32xbf16>, vector<32x128xbf16>, vector<8x128xf32> -> vector<8x128xf32>
    %c0_15 = arith.constant 0 : index
    %c0_16 = arith.constant 0 : index
    %19 = vector.load %arg6[%c0_15, %c0_16] : memref<1x128xf32, #tpu.memory_space<vmem>>, vector<1x128xf32>
    %20 = vector.broadcast %19 : vector<1x128xf32> to vector<8x128xf32>
    %21 = arith.addf %18, %20 : vector<8x128xf32>
    %c0_17 = arith.constant 0 : index
    %c0_18 = arith.constant 0 : index
    %22 = vector.load %arg8[%c0_17, %c0_18] : memref<8x128xf32, #tpu.memory_space<vmem>>, vector<8x128xf32>
    tpu.vector_store %arg8[%c0_17, %c0_18], %21 {strides = array<i32>} : memref<8x128xf32, #tpu.memory_space<vmem>>, vector<8x128xf32>,
    %23 = tpu.iota {dimensions = array<i32: 1>} : vector<8x128xi32>
    %c8_i32 = arith.constant 8 : i32
    %24 = vector.broadcast %c8_i32 : i32 to vector<8x128xi32>
    %25 = arith.cmpi slt, %23, %24 : vector<8x128xi32>
    %cst_19 = arith.constant -1.000000e+30 : f32
    %26 = vector.broadcast %cst_19 : f32 to vector<8x128xf32>
    %27 = arith.select %25, %21, %26 : vector<8x128xi1>, vector<8x128xf32>
    %cst_20 = arith.constant dense<0xFF800000> : vector<8xf32>
    %28 = vector.multi_reduction <maximumf>, %27, %cst_20 [1] : vector<8x128xf32> to vector<8xf32>
    %29 = vector.shape_cast %28 : vector<8xf32> to vector<8x1xf32>
    %30 = vector.broadcast %29 : vector<8x1xf32> to vector<8x128xf32>
    %31 = arith.subf %27, %30 : vector<8x128xf32>
    %32 = math.exp %31 : vector<8x128xf32>
    %cst_21 = arith.constant dense<0.000000e+00> : vector<8xf32>
    %33 = vector.multi_reduction <add>, %32, %cst_21 [1] : vector<8x128xf32> to vector<8xf32>
    %34 = vector.shape_cast %33 : vector<8xf32> to vector<8x1xf32>
    %35 = math.log %34 : vector<8x1xf32>
    %36 = arith.addf %29, %35 : vector<8x1xf32>
    %37 = tpu.iota {dimensions = array<i32: 0>} : vector<8x128xi32>
    %c0_i32 = arith.constant 0 : i32
    %38 = vector.broadcast %c0_i32 : i32 to vector<8x128xi32>
    %c0_i32_22 = arith.constant 0 : i32
    %39 = vector.broadcast %c0_i32_22 : i32 to vector<8x128xi32>
    %40 = arith.cmpi eq, %37, %39 : vector<8x128xi32>
    %c0_23 = arith.constant 0 : index
    %41 = memref.load %arg7[%c0_23] : memref<8xi32, #tpu.memory_space<smem>>
    %42 = vector.broadcast %41 : i32 to vector<8x128xi32>
    %43 = arith.select %40, %42, %38 : vector<8x128xi1>, vector<8x128xi32>
    %c1_i32 = arith.constant 1 : i32
    %44 = vector.broadcast %c1_i32 : i32 to vector<8x128xi32>
    %45 = arith.cmpi eq, %37, %44 : vector<8x128xi32>
    %c1 = arith.constant 1 : index
    %46 = memref.load %arg7[%c1] : memref<8xi32, #tpu.memory_space<smem>>
    %47 = vector.broadcast %46 : i32 to vector<8x128xi32>
    %48 = arith.select %45, %47, %43 : vector<8x128xi1>, vector<8x128xi32>
    %c2_i32 = arith.constant 2 : i32
    %49 = vector.broadcast %c2_i32 : i32 to vector<8x128xi32>
    %50 = arith.cmpi eq, %37, %49 : vector<8x128xi32>
    %c2 = arith.constant 2 : index
    %51 = memref.load %arg7[%c2] : memref<8xi32, #tpu.memory_space<smem>>
    %52 = vector.broadcast %51 : i32 to vector<8x128xi32>
    %53 = arith.select %50, %52, %48 : vector<8x128xi1>, vector<8x128xi32>
    %c3_i32 = arith.constant 3 : i32
    %54 = vector.broadcast %c3_i32 : i32 to vector<8x128xi32>
    %55 = arith.cmpi eq, %37, %54 : vector<8x128xi32>
    %c3 = arith.constant 3 : index
    %56 = memref.load %arg7[%c3] : memref<8xi32, #tpu.memory_space<smem>>
    %57 = vector.broadcast %56 : i32 to vector<8x128xi32>
    %58 = arith.select %55, %57, %53 : vector<8x128xi1>, vector<8x128xi32>
    %c4_i32 = arith.constant 4 : i32
    %59 = vector.broadcast %c4_i32 : i32 to vector<8x128xi32>
    %60 = arith.cmpi eq, %37, %59 : vector<8x128xi32>
    %c4 = arith.constant 4 : index
    %61 = memref.load %arg7[%c4] : memref<8xi32, #tpu.memory_space<smem>>
    %62 = vector.broadcast %61 : i32 to vector<8x128xi32>
    %63 = arith.select %60, %62, %58 : vector<8x128xi1>, vector<8x128xi32>
    %c5_i32 = arith.constant 5 : i32
    %64 = vector.broadcast %c5_i32 : i32 to vector<8x128xi32>
    %65 = arith.cmpi eq, %37, %64 : vector<8x128xi32>
    %c5 = arith.constant 5 : index
    %66 = memref.load %arg7[%c5] : memref<8xi32, #tpu.memory_space<smem>>
    %67 = vector.broadcast %66 : i32 to vector<8x128xi32>
    %68 = arith.select %65, %67, %63 : vector<8x128xi1>, vector<8x128xi32>
    %c6_i32 = arith.constant 6 : i32
    %69 = vector.broadcast %c6_i32 : i32 to vector<8x128xi32>
    %70 = arith.cmpi eq, %37, %69 : vector<8x128xi32>
    %c6 = arith.constant 6 : index
    %71 = memref.load %arg7[%c6] : memref<8xi32, #tpu.memory_space<smem>>
    %72 = vector.broadcast %71 : i32 to vector<8x128xi32>
    %73 = arith.select %70, %72, %68 : vector<8x128xi1>, vector<8x128xi32>
    %c7_i32 = arith.constant 7 : i32
    %74 = vector.broadcast %c7_i32 : i32 to vector<8x128xi32>
    %75 = arith.cmpi eq, %37, %74 : vector<8x128xi32>
    %c7 = arith.constant 7 : index
    %76 = memref.load %arg7[%c7] : memref<8xi32, #tpu.memory_space<smem>>
    %77 = vector.broadcast %76 : i32 to vector<8x128xi32>
    %78 = arith.select %75, %77, %73 : vector<8x128xi1>, vector<8x128xi32>
    %79 = arith.cmpi eq, %23, %78 : vector<8x128xi32>
    %cst_24 = arith.constant 0.000000e+00 : f32
    %80 = vector.broadcast %cst_24 : f32 to vector<8x128xf32>
    %81 = arith.select %79, %21, %80 : vector<8x128xi1>, vector<8x128xf32>
    %cst_25 = arith.constant dense<0.000000e+00> : vector<8xf32>
    %82 = vector.multi_reduction <add>, %81, %cst_25 [1] : vector<8x128xf32> to vector<8xf32>
    %83 = vector.shape_cast %82 : vector<8xf32> to vector<8x1xf32>
    %84 = arith.subf %36, %83 : vector<8x1xf32>
    %85 = vector.shape_cast %84 : vector<8x1xf32> to vector<1x8x1xf32>
    %cst_26 = arith.constant dense<0.000000e+00> : vector<1xf32>
    %86 = vector.multi_reduction <add>, %85, %cst_26 [1, 2] : vector<1x8x1xf32> to vector<1xf32>
    %87 = vector.shape_cast %86 : vector<1xf32> to vector<1x1x1xf32>
    %88 = vector.extract %87[0, 0, 0] : f32 from vector<1x1x1xf32>
    %cst_27 = arith.constant 1.250000e-01 : f32
    %89 = arith.mulf %88, %cst_27 : f32
    %c0_28 = arith.constant 0 : index
    %c0_29 = arith.constant 0 : index
    %90 = memref.load %arg9[%c0_28, %c0_29] : memref<1x1xf32, #tpu.memory_space<smem>>
    memref.store %89, %arg9[%c0_28, %c0_29] : memref<1x1xf32, #tpu.memory_space<smem>>
    return
  }
}

</mosaic_0001>

<llo_original>
// kernel: tpu_custom_call.1
$region0: #{tpu_custom_call.1}
  #allocation0 [shape = 'u32[]', space=smem, size = 0x4, offset = 0x4, fixed_abs, tag = 'smem constant byte address 0x4 - core index']
  #allocation1 [shape = 'u32[144,128]{1,0:T(1,128)}', space=vmem, size = 0x12000, scoped, tag = 'internal scratch']
  %s0 = inlined_call_operand.hbm [shape: bf16[8,32], index: 0, kind: input, shape index: {}]
  %s1 = inlined_call_operand.hbm [shape: bf16[32,32], index: 1, kind: input, shape index: {}]
  %s2 = inlined_call_operand.vmem [shape: f32[1,32], index: 2, kind: input, shape index: {}]
  %s3 = inlined_call_operand.hbm [shape: bf16[32,32], index: 3, kind: input, shape index: {}]
  %s4 = inlined_call_operand.vmem [shape: f32[1,32], index: 4, kind: input, shape index: {}]
  %s5 = inlined_call_operand.vmem [shape: bf16[32,128], index: 5, kind: input, shape index: {}]
  %s6 = inlined_call_operand.vmem [shape: f32[1,128], index: 6, kind: input, shape index: {}]
  %s7 = inlined_call_operand.vmem [shape: s32[8], index: 7, kind: input, shape index: {}]
  %s8 = inlined_call_operand.hbm [shape: f32[8,128], index: 8, kind: output, shape index: {0}]
  %s9 = inlined_call_operand.hbm [shape: f32[1,1], index: 9, kind: output, shape index: {1}]
  %10 = xla_tuple %s8, %s9
  %s11 = sld [smem:[#allocation0]]
  $region66: #{tpu_custom_call.1} parent=0
    _
  %s13 = ssub.s32 1, %s11
  %s14 = scalar_select 0, %s13, %s11
  $region1: #{tpu_custom_call.1} parent=0
    #allocation2 [shape = 'u8[2048]{0}', space=vmem, size = 0x800, scoped, tag = 'input window, operand 0, single buffered']
    #allocation3 [shape = 's32[1]{0}', space=sflag, size = 0x4, scoped, tag = 'scoped memory for tpu_custom_call.1']
    #allocation4 [shape = 's32[1]{0}', space=sflag, size = 0x4, scoped, tag = 'scoped memory for tpu_custom_call.1']
    #allocation5 [shape = 's32[1]{0}', space=sflag, size = 0x4, scoped, tag = 'scoped memory for tpu_custom_call.1']
    #allocation6 [shape = 's32[1]{0}', space=sflag, size = 0x4, scoped, tag = 'scoped memory for tpu_custom_call.1']
    #allocation7 [shape = 'u8[8192]{0}', space=vmem, size = 0x2000, scoped, tag = 'input window, operand 1, single buffered']
    #allocation8 [shape = 's32[1]{0}', space=sflag, size = 0x4, scoped, tag = 'scoped memory for tpu_custom_call.1']
    #allocation9 [shape = 'u8[8192]{0}', space=vmem, size = 0x2000, scoped, tag = 'input window, operand 3, single buffered']
    #allocation10 [shape = 'u8[512]{0}', space=smem, size = 0x200, scoped, tag = 'input window, operand 7, single buffered']
    #allocation11 [shape = 'u8[4096]{0}', space=vmem, size = 0x1000, scoped, tag = 'output window, operand 0, single buffered']
    #allocation12 [shape = 'u8[512]{0}', space=smem, size = 0x200, scoped, tag = 'output window, operand 1, single buffered']
    %15 = vsyncpa [#allocation3], 0
    %16 = vsyncpa [#allocation8], 0
    %17 = vsyncpa [#allocation6], 0
    %18 = vsyncpa [#allocation4], 0
    %19 = vsyncpa [#allocation5], 0
    // Predicated region
    $region2: #{tpu_custom_call.1} parent=1 // pred_check
      _
    $region3: #{tpu_custom_call.1} parent=1 // pred_check_branch
      %21 = sbr.rel (0) target = $region5
    $region4: #{tpu_custom_call.1} parent=1 // pred_region
      %s23 = ssub.s32 64, 64
      %24 = vsyncadd [#allocation3], %s23
      %s26 = sshll.u32 [#allocation2], 4
      %s27 = int_to_ptr.vmem [resolvable:$true] %s26
      %29 = dma.hbm_to_vmem [thread:$0]  %s0, 64, %s27, [#allocation3]
    $region5: #{tpu_custom_call.1} parent=1 // pred_fallthru
      _
    // Predicated region
    $region6: #{tpu_custom_call.1} parent=1 // pred_check
      _
    $region7: #{tpu_custom_call.1} parent=1 // pred_check_branch
      %31 = sbr.rel (0) target = $region9
    $region8: #{tpu_custom_call.1} parent=1 // pred_region
      %s33 = ssub.s32 256, 256
      %34 = vsyncadd [#allocation8], %s33
      %s35 = sshll.u32 [#allocation7], 4
      %s36 = int_to_ptr.vmem [resolvable:$true] %s35
      %41 = dma.hbm_to_vmem [thread:$0]  %s1, 256, %s36, [#allocation8], 64, 64, 4
    $region9: #{tpu_custom_call.1} parent=1 // pred_fallthru
      _
    // Predicated region
    $region10: #{tpu_custom_call.1} parent=1 // pred_check
      _
    $region11: #{tpu_custom_call.1} parent=1 // pred_check_branch
      %43 = sbr.rel (0) target = $region13
    $region12: #{tpu_custom_call.1} parent=1 // pred_region
      _
    $region13: #{tpu_custom_call.1} parent=1 // pred_fallthru
      _
    // Predicated region
    $region14: #{tpu_custom_call.1} parent=1 // pred_check
      _
    $region15: #{tpu_custom_call.1} parent=1 // pred_check_branch
      %45 = sbr.rel (0) target = $region17
    $region16: #{tpu_custom_call.1} parent=1 // pred_region
      %s47 = ssub.s32 256, 256
      %48 = vsyncadd [#allocation8], %s47
      %s49 = sshll.u32 [#allocation9], 4
      %s50 = int_to_ptr.vmem [resolvable:$true] %s49
      %55 = dma.hbm_to_vmem [thread:$0]  %s3, 256, %s50, [#allocation8], 64, 64, 4
    $region17: #{tpu_custom_call.1} parent=1 // pred_fallthru
      _
    // Predicated region
    $region18: #{tpu_custom_call.1} parent=1 // pred_check
      _
    $region19: #{tpu_custom_call.1} parent=1 // pred_check_branch
      %57 = sbr.rel (0) target = $region21
    $region20: #{tpu_custom_call.1} parent=1 // pred_region
      _
    $region21: #{tpu_custom_call.1} parent=1 // pred_fallthru
      _
    // Predicated region
    $region22: #{tpu_custom_call.1} parent=1 // pred_check
      _
    $region23: #{tpu_custom_call.1} parent=1 // pred_check_branch
      %59 = sbr.rel (0) target = $region25
    $region24: #{tpu_custom_call.1} parent=1 // pred_region
      _
    $region25: #{tpu_custom_call.1} parent=1 // pred_fallthru
      _
    // Predicated region
    $region26: #{tpu_custom_call.1} parent=1 // pred_check
      _
    $region27: #{tpu_custom_call.1} parent=1 // pred_check_branch
      %61 = sbr.rel (0) target = $region29
    $region28: #{tpu_custom_call.1} parent=1 // pred_region
      _
    $region29: #{tpu_custom_call.1} parent=1 // pred_fallthru
      _
    // Predicated region
    $region30: #{tpu_custom_call.1} parent=1 // pred_check
      _
    $region31: #{tpu_custom_call.1} parent=1 // pred_check_branch
      %63 = sbr.rel (0) target = $region33
    $region32: #{tpu_custom_call.1} parent=1 // pred_region
      %s65 = ssub.s32 16, 16
      %66 = vsyncadd [#allocation6], %s65
      %s68 = sshll.u32 %s7, 4
      %s69 = int_to_ptr.vmem [resolvable:$true] %s68
      %71 = dma.vmem_to_smem %s69, 16, [#allocation10], [#allocation6]
    $region33: #{tpu_custom_call.1} parent=1 // pred_fallthru
      _
    // Predicated region
    $region34: #{tpu_custom_call.1} parent=1 // pred_check
      _
    $region35: #{tpu_custom_call.1} parent=1 // pred_check_branch
      %73 = sbr.rel (0) target = $region37
    $region36: #{tpu_custom_call.1} parent=1 // pred_region
      %74 = dma.done [#allocation3], 64
    $region37: #{tpu_custom_call.1} parent=1 // pred_fallthru
      _
    // Predicated region
    $region38: #{tpu_custom_call.1} parent=1 // pred_check
      _
    $region39: #{tpu_custom_call.1} parent=1 // pred_check_branch
      %76 = sbr.rel (0) target = $region41
    $region40: #{tpu_custom_call.1} parent=1 // pred_region
      %77 = dma.done [#allocation8], 256
    $region41: #{tpu_custom_call.1} parent=1 // pred_fallthru
      _
    // Predicated region
    $region42: #{tpu_custom_call.1} parent=1 // pred_check
      _
    $region43: #{tpu_custom_call.1} parent=1 // pred_check_branch
      %79 = sbr.rel (0) target = $region45
    $region44: #{tpu_custom_call.1} parent=1 // pred_region
      %80 = dma.done [#allocation8], 256
    $region45: #{tpu_custom_call.1} parent=1 // pred_fallthru
      _
    // Predicated region
    $region46: #{tpu_custom_call.1} parent=1 // pred_check
      _
    $region47: #{tpu_custom_call.1} parent=1 // pred_check_branch
      %82 = sbr.rel (0) target = $region49
    $region48: #{tpu_custom_call.1} parent=1 // pred_region
      %83 = dma.done [#allocation6], 16
    $region49: #{tpu_custom_call.1} parent=1 // pred_fallthru
      _
    %84 = sfence
    %v86 = vld [vmem:[#allocation2] sm:$0xf]
    %v87 = vld [vmem:[#allocation7] sm:$0xf]
    %v88 = vld [vmem:[#allocation7 + $0x4] sm:$0xf]
    %v89 = vld [vmem:[#allocation7 + $0x8] sm:$0xf]
    %v90 = vld [vmem:[#allocation7 + $0xc] sm:$0xf]
    %v91 = vld [vmem:[%s2] sm:$0x1]
    %v93 = vlaneseq
    %v94 = vshrl.u32 %v93, 7
    %v95 = vsub.s32 0, %v94
    %v96 = vrot.slane %v91, %v95
    %v102 = vunpack.c.l.b16 %v87
    %v103 = vunpack.c.l.b16 %v88
    %v104 = vunpack.c.l.b16 %v89
    %v105 = vunpack.c.l.b16 %v90
    %v106 = vpack.c.b16 %v103, %v102
    %v107 = vpack.c.b16 %v105, %v104
    %vm110 = vcmask 261120
    %v112 = vsel %vm110, %v86, 0
    %114 = vmatprep.subr.bf16.mxu0 0
    %115 = vmatpush1.bf16.msra.mxu0 %v106
    %116 = vmatprep.subr.bf16.mxu0 0
    %117 = vmatpush1.bf16.msra.mxu0 %v107
    %118 = vmatprep.subr.bf16.mxu0 0
    %119 = vmatpush1.bf16.msra.mxu0 0
    %120 = vmatprep.subr.bf16.mxu0 0
    %121 = vmatpush1.bf16.msra.mxu0 0
    %122 = vmatprep.subr.bf16.mxu0 0
    %123 = vmatpush1.bf16.msra.mxu0 0
    %124 = vmatprep.subr.bf16.mxu0 0
    %125 = vmatpush1.bf16.msra.mxu0 0
    %126 = vmatprep.subr.bf16.mxu0 0
    %127 = vmatpush1.bf16.msra.mxu0 0
    %128 = vmatprep.subr.bf16.mxu0 0
    %129 = vmatpush1.bf16.msra.mxu0 0
    %130 = vmatprep.subr.bf16.mxu0 0
    %131 = vmatpush1.bf16.msra.mxu0 0
    %132 = vmatprep.subr.bf16.mxu0 0
    %133 = vmatpush1.bf16.msra.mxu0 0
    %134 = vmatprep.subr.bf16.mxu0 0
    %135 = vmatpush1.bf16.msra.mxu0 0
    %136 = vmatprep.subr.bf16.mxu0 0
    %137 = vmatpush1.bf16.msra.mxu0 0
    %138 = vmatprep.subr.bf16.mxu0 0
    %139 = vmatpush1.bf16.msra.mxu0 0
    %140 = vmatprep.subr.bf16.mxu0 0
    %141 = vmatpush1.bf16.msra.mxu0 0
    %142 = vmatprep.subr.bf16.mxu0 0
    %143 = vmatpush1.bf16.msra.mxu0 0
    %144 = vmatprep.subr.bf16.mxu0 0
    %145 = vmatpush1.bf16.msra.mxu0 0
    %146 = vmatprep.mubr.bf16.mxu0 0
    %147 = vmatmul.mubr.bf16.gmra.mrb[0].mxu0 %v112
    %v148 = vpop.f32.mrb[0].mxu0
    %v149 = vadd.f32 %v96, %v148
    %v150 = vpop.f32.mrb[0].mxu0
    %v151 = vpop.f32.mrb[0].mxu0
    %v152 = vpop.f32.mrb[0].mxu0
    %153 = vdwg.mxu0
    %v154 = vmax.f32 %v149, 0.0
    %v155 = vpack.c.bf16 %v154, %v154
    %v156 = vld [vmem:[#allocation9] sm:$0xf]
    %v157 = vld [vmem:[#allocation9 + $0x4] sm:$0xf]
    %v158 = vld [vmem:[#allocation9 + $0x8] sm:$0xf]
    %v159 = vld [vmem:[#allocation9 + $0xc] sm:$0xf]
    %v160 = vld [vmem:[%s4] sm:$0x1]
    %v162 = vlaneseq
    %v163 = vshrl.u32 %v162, 7
    %v164 = vsub.s32 0, %v163
    %v165 = vrot.slane %v160, %v164
    %v171 = vunpack.c.l.b16 %v156
    %v172 = vunpack.c.l.b16 %v157
    %v173 = vunpack.c.l.b16 %v158
    %v174 = vunpack.c.l.b16 %v159
    %v175 = vpack.c.b16 %v172, %v171
    %v176 = vpack.c.b16 %v174, %v173
    %v180 = vsel %vm110, %v155, 0
    %182 = vmatprep.subr.bf16.mxu0 0
    %183 = vmatpush1.bf16.msra.mxu0 %v175
    %184 = vmatprep.subr.bf16.mxu0 0
    %185 = vmatpush1.bf16.msra.mxu0 %v176
    %186 = vmatprep.subr.bf16.mxu0 0
    %187 = vmatpush1.bf16.msra.mxu0 0
    %188 = vmatprep.subr.bf16.mxu0 0
    %189 = vmatpush1.bf16.msra.mxu0 0
    %190 = vmatprep.subr.bf16.mxu0 0
    %191 = vmatpush1.bf16.msra.mxu0 0
    %192 = vmatprep.subr.bf16.mxu0 0
    %193 = vmatpush1.bf16.msra.mxu0 0
    %194 = vmatprep.subr.bf16.mxu0 0
    %195 = vmatpush1.bf16.msra.mxu0 0
    %196 = vmatprep.subr.bf16.mxu0 0
    %197 = vmatpush1.bf16.msra.mxu0 0
    %198 = vmatprep.subr.bf16.mxu0 0
    %199 = vmatpush1.bf16.msra.mxu0 0
    %200 = vmatprep.subr.bf16.mxu0 0
    %201 = vmatpush1.bf16.msra.mxu0 0
    %202 = vmatprep.subr.bf16.mxu0 0
    %203 = vmatpush1.bf16.msra.mxu0 0
    %204 = vmatprep.subr.bf16.mxu0 0
    %205 = vmatpush1.bf16.msra.mxu0 0
    %206 = vmatprep.subr.bf16.mxu0 0
    %207 = vmatpush1.bf16.msra.mxu0 0
    %208 = vmatprep.subr.bf16.mxu0 0
    %209 = vmatpush1.bf16.msra.mxu0 0
    %210 = vmatprep.subr.bf16.mxu0 0
    %211 = vmatpush1.bf16.msra.mxu0 0
    %212 = vmatprep.subr.bf16.mxu0 0
    %213 = vmatpush1.bf16.msra.mxu0 0
    %214 = vmatprep.mubr.bf16.mxu0 0
    %215 = vmatmul.mubr.bf16.gmra.mrb[0].mxu0 %v180
    %v216 = vpop.f32.mrb[0].mxu0
    %v217 = vadd.f32 %v165, %v216
    %v218 = vpop.f32.mrb[0].mxu0
    %v219 = vpop.f32.mrb[0].mxu0
    %v220 = vpop.f32.mrb[0].mxu0
    %221 = vdwg.mxu0
    %v222 = vmax.f32 %v217, 0.0
    %v223 = vpack.c.bf16 %v222, %v222
    %v224 = vld [vmem:[%s5] sm:$0xf]
    %v225 = vld [vmem:[%s5 + $0x4] sm:$0xf]
    %v226 = vld [vmem:[%s5 + $0x8] sm:$0xf]
    %v227 = vld [vmem:[%s5 + $0xc] sm:$0xf]
    %v228 = vld [vmem:[%s6] sm:$0x1]
    %v230 = vlaneseq
    %v231 = vshrl.u32 %v230, 7
    %v232 = vsub.s32 0, %v231
    %v233 = vrot.slane %v228, %v232
    %v239 = vunpack.c.l.b16 %v224
    %v240 = vunpack.c.l.b16 %v225
    %v241 = vunpack.c.l.b16 %v226
    %v242 = vunpack.c.l.b16 %v227
    %v243 = vpack.c.b16 %v240, %v239
    %v244 = vpack.c.b16 %v242, %v241
    %v248 = vsel %vm110, %v223, 0
    %250 = vmatprep.subr.bf16.mxu0 0
    %251 = vmatpush1.bf16.msra.mxu0 %v243
    %252 = vmatprep.subr.bf16.mxu0 0
    %253 = vmatpush1.bf16.msra.mxu0 %v244
    %254 = vmatprep.subr.bf16.mxu0 0
    %255 = vmatpush1.bf16.msra.mxu0 0
    %256 = vmatprep.subr.bf16.mxu0 0
    %257 = vmatpush1.bf16.msra.mxu0 0
    %258 = vmatprep.subr.bf16.mxu0 0
    %259 = vmatpush1.bf16.msra.mxu0 0
    %260 = vmatprep.subr.bf16.mxu0 0
    %261 = vmatpush1.bf16.msra.mxu0 0
    %262 = vmatprep.subr.bf16.mxu0 0
    %263 = vmatpush1.bf16.msra.mxu0 0
    %264 = vmatprep.subr.bf16.mxu0 0
    %265 = vmatpush1.bf16.msra.mxu0 0
    %266 = vmatprep.subr.bf16.mxu0 0
    %267 = vmatpush1.bf16.msra.mxu0 0
    %268 = vmatprep.subr.bf16.mxu0 0
    %269 = vmatpush1.bf16.msra.mxu0 0
    %270 = vmatprep.subr.bf16.mxu0 0
    %271 = vmatpush1.bf16.msra.mxu0 0
    %272 = vmatprep.subr.bf16.mxu0 0
    %273 = vmatpush1.bf16.msra.mxu0 0
    %274 = vmatprep.subr.bf16.mxu0 0
    %275 = vmatpush1.bf16.msra.mxu0 0
    %276 = vmatprep.subr.bf16.mxu0 0
    %277 = vmatpush1.bf16.msra.mxu0 0
    %278 = vmatprep.subr.bf16.mxu0 0
    %279 = vmatpush1.bf16.msra.mxu0 0
    %280 = vmatprep.subr.bf16.mxu0 0
    %281 = vmatpush1.bf16.msra.mxu0 0
    %282 = vmatprep.mubr.bf16.mxu0 0
    %283 = vmatmul.mubr.bf16.gmra.mrb[0].mxu0 %v248
    %v284 = vpop.f32.mrb[0].mxu0
    %v285 = vadd.f32 %v233, %v284
    %v286 = vpop.f32.mrb[0].mxu0
    %v287 = vpop.f32.mrb[0].mxu0
    %v288 = vpop.f32.mrb[0].mxu0
    %289 = vdwg.mxu0
    %290 = vst [vmem:[#allocation11] sm:$0xff] %v285
    %v291 = vlaneseq
    %v292 = vand.u32 %v291, 127
    %vm293 = vcmp.lt.s32.totalorder %v292, 8
    %v294 = vsel %vm293, %v285, -1e+30
    %295 = vmax.xlane.f32.xlu0 %v294
    %v296 = vpop.xlane.xlu0 %295
    %v297 = vsub.f32 %v294, %v296
    %v298 = vmul.f32 %v297, 1.442695
    %v299 = vpow.pop %v298
    %300 = vadd.xlane.f32.xlu0 %v299
    %v301 = vpop.xlane.xlu0 %300
    %v302 = vlog2.pop %v301
    %v303 = vmul.f32 %v302, 0.6931472
    %v304 = vadd.f32 %v296, %v303
    %v305 = vlaneseq
    %v306 = vshrl.u32 %v305, 7
    %vm307 = vcmp.eq.s32.totalorder %v306, 0
    %s308 = sld [smem:[#allocation10]]
    %v309 = vstv %s308
    %v310 = vsel %vm307, %v309, 0
    %vm311 = vcmp.eq.s32.totalorder %v306, 1
    %s312 = sld [smem:[#allocation10 + $0x1]]
    %v313 = vstv %s312
    %v314 = vsel %vm311, %v313, %v310
    %vm315 = vcmp.eq.s32.totalorder %v306, 2
    %s316 = sld [smem:[#allocation10 + $0x2]]
    %v317 = vstv %s316
    %v318 = vsel %vm315, %v317, %v314
    %vm319 = vcmp.eq.s32.totalorder %v306, 3
    %s320 = sld [smem:[#allocation10 + $0x3]]
    %v321 = vstv %s320
    %v322 = vsel %vm319, %v321, %v318
    %vm323 = vcmp.eq.s32.totalorder %v306, 4
    %s324 = sld [smem:[#allocation10 + $0x4]]
    %v325 = vstv %s324
    %v326 = vsel %vm323, %v325, %v322
    %vm327 = vcmp.eq.s32.totalorder %v306, 5
    %s328 = sld [smem:[#allocation10 + $0x5]]
    %v329 = vstv %s328
    %v330 = vsel %vm327, %v329, %v326
    %vm331 = vcmp.eq.s32.totalorder %v306, 6
    %s332 = sld [smem:[#allocation10 + $0x6]]
    %v333 = vstv %s332
    %v334 = vsel %vm331, %v333, %v330
    %vm335 = vcmp.eq.s32.totalorder %v306, 7
    %s336 = sld [smem:[#allocation10 + $0x7]]
    %v337 = vstv %s336
    %v338 = vsel %vm335, %v337, %v334
    %vm339 = vcmp.eq.s32.totalorder %v292, %v338
    %v340 = vsel %vm339, %v285, 0.0
    %341 = vadd.xlane.f32.xlu0 %v340
    %v342 = vpop.xlane.xlu0 %341
    %v343 = vsub.f32 %v304, %v342
    %vm344 = vcmask 7168
    %v345 = vsel %vm344, %v343, 0.0
    %346 = vadd.xlane.f32.xlu0 %v345
    %v347 = vpop.xlane.xlu0 %346
    %v348 = vrot.slane %v347, 4
    %v349 = vadd.f32 %v347, %v348
    %v350 = vrot.slane %v349, 2
    %v351 = vadd.f32 %v349, %v350
    %v352 = vrot.slane %v351, 1
    %v353 = vadd.f32 %v351, %v352
    %s354 = vtos %v353
    %s355 = smul.f32 %s354, 0.125
    %s356 = scalar_lea.smem [#allocation12], 0
    %357 = sst [smem:[%s356]] %s355
    // Predicated region
    $region50: #{tpu_custom_call.1} parent=1 // pred_check
      _
    $region51: #{tpu_custom_call.1} parent=1 // pred_check_branch
      %359 = sbr.rel (0) target = $region53
    $region52: #{tpu_custom_call.1} parent=1 // pred_region
      %s361 = ssub.s32 128, 128
      %362 = vsyncadd [#allocation4], %s361
      %s364 = sshll.u32 [#allocation11], 4
      %s365 = int_to_ptr.vmem [resolvable:$true] %s364
      %367 = dma.vmem_to_hbm [thread:$0]  %s365, 128, %s8, [#allocation4]
    $region53: #{tpu_custom_call.1} parent=1 // pred_fallthru
      _
    // Predicated region
    $region54: #{tpu_custom_call.1} parent=1 // pred_check
      _
    $region55: #{tpu_custom_call.1} parent=1 // pred_check_branch
      %369 = sbr.rel (0) target = $region57
    $region56: #{tpu_custom_call.1} parent=1 // pred_region
      %s371 = ssub.s32 16, 16
      %372 = vsyncadd [#allocation5], %s371
      %375 = dma.smem_to_hbm [#allocation12], 16, %s9, [#allocation5]
    $region57: #{tpu_custom_call.1} parent=1 // pred_fallthru
      _
    // Predicated region
    $region58: #{tpu_custom_call.1} parent=1 // pred_check
      _
    $region59: #{tpu_custom_call.1} parent=1 // pred_check_branch
      %377 = sbr.rel (0) target = $region61
    $region60: #{tpu_custom_call.1} parent=1 // pred_region
      %378 = dma.done [#allocation4], 128
    $region61: #{tpu_custom_call.1} parent=1 // pred_fallthru
      _
    // Predicated region
    $region62: #{tpu_custom_call.1} parent=1 // pred_check
      _
    $region63: #{tpu_custom_call.1} parent=1 // pred_check_branch
      %380 = sbr.rel (0) target = $region65
    $region64: #{tpu_custom_call.1} parent=1 // pred_region
      %381 = dma.done [#allocation5], 16
    $region65: #{tpu_custom_call.1} parent=1 // pred_fallthru
      _
    %382 = sfence
    %383 = vsyncpa [#allocation3], 1
    %384 = vsyncpa [#allocation8], 1
    %385 = vsyncpa [#allocation4], 1
    %386 = vsyncpa [#allocation5], 1
    %387 = vsyncpa [#allocation6], 1

</llo_original>
